<compile_context>
chip_gen: v7x
topology: tpu7x:2x2x1
jax: 0.10.0
libtpu: 0.0.40
codegen_flags: <defaults>
</compile_context>

<pallas_src>
import jax
import jax.numpy as jnp
from jax.experimental import pallas as pl
from jax.experimental.pallas import tpu as pltpu

HIDDEN = 128   # fixed by the module: fc_1(state_size -> 128)
LANE = 128     # TPU lane width; fc_2 feature dim is padded to this for lane-dense stores


def _mlp_kernel(x_ref, w1_ref, b1_ref, w2_ref, b2_ref, o_ref):
    """One batch tile of fc_2(relu(fc_1(x))); weights are VMEM-resident across the grid."""
    x = x_ref[...]                                                  # (TB, S) bf16
    h = jnp.dot(x, w1_ref[...], preferred_element_type=jnp.float32)  # MXU, f32 acc
    h = jnp.maximum(h + b1_ref[...], 0.0)                            # f32 bias + ReLU (VPU)
    y = jnp.dot(h.astype(w2_ref.dtype), w2_ref[...],
                preferred_element_type=jnp.float32)                  # MXU, f32 acc
    o_ref[...] = (y + b2_ref[...]).astype(o_ref.dtype)               # lane-dense store


def pack_params(w1, b1, w2, b2):
    """One-time parameter prep (hoisted out of the per-call dispatch path).

    w1: (state_size, 128), b1: (128,), w2: (128, num_attributes), b2: (num_attributes,)
    Returns bf16 weights, (1, N) f32 biases, with the fc_2 feature dim zero-padded to 128.
    """
    S, H = w1.shape
    A = w2.shape[1]
    a_pad = max(LANE, pl.cdiv(A, LANE) * LANE)
    w2p = jnp.zeros((H, a_pad), jnp.float32).at[:, :A].set(w2)
    b2p = jnp.zeros((1, a_pad), jnp.float32).at[0, :A].set(b2)
    return (w1.astype(jnp.bfloat16),
            b1.reshape(1, H).astype(jnp.float32),
            w2p.astype(jnp.bfloat16),
            b2p,
            A)


def attr_choice_smorl_forward(state, packed, *, tile_b=512):
    """state: (B, state_size) f32. packed: output of pack_params. Returns (B, num_attributes) f32."""
    w1, b1, w2, b2, num_attributes = packed
    B, S = state.shape
    H = w1.shape[1]
    a_pad = w2.shape[1]

    # Batch tile: multiple of 8 (sublane rule), padded batch a multiple of the tile.
    tb = max(8, min(tile_b, pl.cdiv(B, 8) * 8))
    b_pad = pl.cdiv(B, tb) * tb
    x = state.astype(jnp.bfloat16)
    if b_pad != B:
        x = jnp.pad(x, ((0, b_pad - B), (0, 0)))
    n_b = b_pad // tb

    cost = pl.CostEstimate(
        flops=2 * b_pad * (S * H + H * a_pad),
        transcendentals=0,
        bytes_accessed=(b_pad * S * 2            # bf16 state
                        + S * H * 2 + H * a_pad * 2   # bf16 weights
                        + H * 4 + a_pad * 4           # f32 biases
                        + b_pad * a_pad * 4))         # f32 output

    out = pl.pallas_call(
        _mlp_kernel,
        out_shape=jax.ShapeDtypeStruct((b_pad, a_pad), jnp.float32),
        grid=(n_b,),
        in_specs=[
            pl.BlockSpec((tb, S), lambda i: (i, 0)),       # state: streamed per B-tile
            pl.BlockSpec((S, H), lambda i: (0, 0)),        # weights/biases: VMEM-resident
            pl.BlockSpec((1, H), lambda i: (0, 0)),
            pl.BlockSpec((H, a_pad), lambda i: (0, 0)),
            pl.BlockSpec((1, a_pad), lambda i: (0, 0)),
        ],
        out_specs=pl.BlockSpec((tb, a_pad), lambda i: (i, 0)),
        compiler_params=pltpu.CompilerParams(
            dimension_semantics=("parallel",)),            # use both TCs on v7x
        cost_estimate=cost,
    )(x, w1, b1, w2, b2)

    return out[:B, :num_attributes]


if __name__ == "__main__":
    # Small shapes consistent with the module: fc_1(state_size -> 128) -> relu -> fc_2(128 -> num_attributes)
    batch = 40            # not a tile multiple, exercises batch padding + multi-step grid
    state_size = 32
    num_attributes = 16

    key = jax.random.PRNGKey(0)
    kx, k1, k2, k3, k4 = jax.random.split(key, 5)
    lim1 = 1.0 / jnp.sqrt(state_size)
    lim2 = 1.0 / jnp.sqrt(HIDDEN)
    state = jax.random.normal(kx, (batch, state_size), jnp.float32)
    # weights stored as (in, out) == transpose of torch's (out, in)
    w1 = jax.random.uniform(k1, (state_size, HIDDEN), jnp.float32, -lim1, lim1)
    b1 = jax.random.uniform(k2, (HIDDEN,), jnp.float32, -lim1, lim1)
    w2 = jax.random.uniform(k3, (HIDDEN, num_attributes), jnp.float32, -lim2, lim2)
    b2 = jax.random.uniform(k4, (num_attributes,), jnp.float32, -lim2, lim2)

    packed = pack_params(w1, b1, w2, b2)
    out = attr_choice_smorl_forward(state, packed, tile_b=16)  # small tile -> 3 grid steps
    out = jax.block_until_ready(out)

    # Reference mirroring the kernel numerics (bf16 inputs, f32 accumulate/epilogue).
    xf = state.astype(jnp.bfloat16).astype(jnp.float32)
    w1f = w1.astype(jnp.bfloat16).astype(jnp.float32)
    w2f = w2.astype(jnp.bfloat16).astype(jnp.float32)
    h_ref = jnp.maximum(xf @ w1f + b1, 0.0)
    ref = h_ref.astype(jnp.bfloat16).astype(jnp.float32) @ w2f + b2

    assert out.shape == (batch, num_attributes)
    assert jnp.allclose(out, ref, atol=2e-3, rtol=2e-3), float(jnp.max(jnp.abs(out - ref)))
    print("KERNEL_OK")
</pallas_src>

<mosaic_0001>
module attributes {stable_mosaic.version = 11 : i64} {
  func.func @_mlp_kernel(%arg0: i32, %arg1: memref<16x32xbf16, #tpu.memory_space<vmem>>, %arg2: memref<32x128xbf16, #tpu.memory_space<vmem>>, %arg3: memref<1x128xf32, #tpu.memory_space<vmem>>, %arg4: memref<128x128xbf16, #tpu.memory_space<vmem>>, %arg5: memref<1x128xf32, #tpu.memory_space<vmem>>, %arg6: memref<16x128xf32, #tpu.memory_space<vmem>>) attributes {dimension_semantics = [#tpu.dimension_semantics<parallel>], iteration_bounds = array<i64: 3>, scalar_prefetch = 0 : i64, scratch_operands = 0 : i64, tpu.core_type = #tpu.core_type<tc>, window_params = [{transform_indices = @transform_0, window_bounds = array<i64: 16, 32>}, {pipeline_mode = #tpu.pipeline_mode<synchronous>, transform_indices = @transform_1, window_bounds = array<i64: 32, 128>}, {pipeline_mode = #tpu.pipeline_mode<synchronous>, transform_indices = @transform_2, window_bounds = array<i64: 1, 128>}, {pipeline_mode = #tpu.pipeline_mode<synchronous>, transform_indices = @transform_3, window_bounds = array<i64: 128, 128>}, {pipeline_mode = #tpu.pipeline_mode<synchronous>, transform_indices = @transform_4, window_bounds = array<i64: 1, 128>}, {transform_indices = @transform_5, window_bounds = array<i64: 16, 128>}]} {
    %c0 = arith.constant 0 : index
    %c0_0 = arith.constant 0 : index
    %0 = vector.load %arg1[%c0, %c0_0] : memref<16x32xbf16, #tpu.memory_space<vmem>>, vector<16x32xbf16>
    %c0_1 = arith.constant 0 : index
    %c0_2 = arith.constant 0 : index
    %1 = vector.load %arg2[%c0_1, %c0_2] : memref<32x128xbf16, #tpu.memory_space<vmem>>, vector<32x128xbf16>
    %cst = arith.constant dense<0.000000e+00> : vector<16x128xf32>
    %2 = tpu.matmul %0, %1, %cst {dimension_numbers = #tpu.dot_dimension_numbers<[1], [0], [0], [1], [0, 0, 1, 1], [], []>} : vector<16x32xbf16>, vector<32x128xbf16>, vector<16x128xf32> -> vector<16x128xf32>
    %c0_3 = arith.constant 0 : index
    %c0_4 = arith.constant 0 : index
    %3 = vector.load %arg3[%c0_3, %c0_4] : memref<1x128xf32, #tpu.memory_space<vmem>>, vector<1x128xf32>
    %4 = vector.broadcast %3 : vector<1x128xf32> to vector<16x128xf32>
    %5 = arith.addf %2, %4 : vector<16x128xf32>
    %cst_5 = arith.constant 0.000000e+00 : f32
    %6 = vector.broadcast %cst_5 : f32 to vector<16x128xf32>
    %7 = arith.maximumf %5, %6 : vector<16x128xf32>
    %8 = arith.truncf %7 : vector<16x128xf32> to vector<16x128xbf16>
    %c0_6 = arith.constant 0 : index
    %c0_7 = arith.constant 0 : index
    %9 = vector.load %arg4[%c0_6, %c0_7] : memref<128x128xbf16, #tpu.memory_space<vmem>>, vector<128x128xbf16>
    %cst_8 = arith.constant dense<0.000000e+00> : vector<16x128xf32>
    %10 = tpu.matmul %8, %9, %cst_8 {dimension_numbers = #tpu.dot_dimension_numbers<[1], [0], [0], [1], [0, 0, 1, 1], [], []>} : vector<16x128xbf16>, vector<128x128xbf16>, vector<16x128xf32> -> vector<16x128xf32>
    %c0_9 = arith.constant 0 : index
    %c0_10 = arith.constant 0 : index
    %11 = vector.load %arg5[%c0_9, %c0_10] : memref<1x128xf32, #tpu.memory_space<vmem>>, vector<1x128xf32>
    %12 = vector.broadcast %11 : vector<1x128xf32> to vector<16x128xf32>
    %13 = arith.addf %10, %12 : vector<16x128xf32>
    %c0_11 = arith.constant 0 : index
    %c0_12 = arith.constant 0 : index
    %14 = vector.load %arg6[%c0_11, %c0_12] : memref<16x128xf32, #tpu.memory_space<vmem>>, vector<16x128xf32>
    tpu.vector_store %arg6[%c0_11, %c0_12], %13 {strides = array<i32>} : memref<16x128xf32, #tpu.memory_space<vmem>>, vector<16x128xf32>,
    return
  }
  func.func @transform_0(%arg0: i32) -> (i32, i32) {
    %c0_i32 = arith.constant 0 : i32
    %c0_i32_0 = arith.constant 0 : i32
    return %arg0, %c0_i32 : i32, i32
  }
  func.func @transform_1(%arg0: i32) -> (i32, i32) {
    %c0_i32 = arith.constant 0 : i32
    %c0_i32_0 = arith.constant 0 : i32
    %c0_i32_1 = arith.constant 0 : i32
    return %c0_i32, %c0_i32_0 : i32, i32
  }
  func.func @transform_2(%arg0: i32) -> (i32, i32) {
    %c0_i32 = arith.constant 0 : i32
    %c0_i32_0 = arith.constant 0 : i32
    %c0_i32_1 = arith.constant 0 : i32
    return %c0_i32, %c0_i32_0 : i32, i32
  }
  func.func @transform_3(%arg0: i32) -> (i32, i32) {
    %c0_i32 = arith.constant 0 : i32
    %c0_i32_0 = arith.constant 0 : i32
    %c0_i32_1 = arith.constant 0 : i32
    return %c0_i32, %c0_i32_0 : i32, i32
  }
  func.func @transform_4(%arg0: i32) -> (i32, i32) {
    %c0_i32 = arith.constant 0 : i32
    %c0_i32_0 = arith.constant 0 : i32
    %c0_i32_1 = arith.constant 0 : i32
    return %c0_i32, %c0_i32_0 : i32, i32
  }
  func.func @transform_5(%arg0: i32) -> (i32, i32) {
    %c0_i32 = arith.constant 0 : i32
    %c0_i32_0 = arith.constant 0 : i32
    return %arg0, %c0_i32 : i32, i32
  }
}

</mosaic_0001>

<llo_original>
// kernel: tpu_custom_call.1
$region0: #{tpu_custom_call.1}
  #allocation0 [shape = 'u32[]', space=smem, size = 0x4, offset = 0x4, fixed_abs, tag = 'smem constant byte address 0x4 - core index']
  #allocation1 [shape = 'u32[144,128]{1,0:T(1,128)}', space=vmem, size = 0x12000, scoped, tag = 'internal scratch']
  %s0 = inlined_call_operand.vmem [shape: bf16[48,32], index: 0, kind: input, shape index: {}]
  %s1 = inlined_call_operand.vmem [shape: bf16[32,128], index: 1, kind: input, shape index: {}]
  %s2 = inlined_call_operand.vmem [shape: f32[1,128], index: 2, kind: input, shape index: {}]
  %s3 = inlined_call_operand.hbm [shape: bf16[128,128], index: 3, kind: input, shape index: {}]
  %s4 = inlined_call_operand.vmem [shape: f32[1,128], index: 4, kind: input, shape index: {}]
  %s5 = inlined_call_operand.hbm [shape: f32[48,128], index: 5, kind: output, shape index: {}]
  %s6 = sld [smem:[#allocation0]]
  $region57: #{tpu_custom_call.1} parent=0
    _
  %s8 = ssub.s32 1, %s6
  %s9 = scalar_select 0, %s8, %s6
  $region1: #{tpu_custom_call.1} parent=0
    #allocation2 [shape = 'u8[32768]{0}', space=vmem, size = 0x8000, scoped, tag = 'input window, operand 3, single buffered']
    #allocation3 [shape = 's32[2]{0}', space=sflag, size = 0x8, scoped, tag = 'scoped memory for tpu_custom_call.1']
    #allocation4 [shape = 's32[2]{0}', space=sflag, size = 0x8, scoped, tag = 'scoped memory for tpu_custom_call.1']
    #allocation5 [shape = 'u8[16384]{0}', space=vmem, size = 0x4000, scoped, tag = 'output window, operand 0']
    %10 = vsyncpa [#allocation3], 0
    %11 = vsyncpa [#allocation4], 0
    %s12 = scalar_lea.sflag [#allocation4], 1
    %13 = vsyncpa %s12, 0
    loop: start=0, step=1, limit=5
    $region2: #{tpu_custom_call.1} parent=1 // loop_pre_header
      _
    $region3: #{tpu_custom_call.1} parent=1 // loop_header
      %s15 = sphi 0, %s19
      %p16 = scmp.ge.s32.totalorder %s15, 5
      %s25 = sphi 0, %s27
      %s28 = sphi 0, %s25
      %s29 = sphi 0, %s28
      %s45 = sphi 0, %s29
      %s49 = sphi 0, %s49
      %s51 = sphi 0, %s49
      %s52 = sphi 0, %s51
      %s66 = sphi 0, %s52
      %s70 = sphi 0, %s70
      %s72 = sphi 0, %s70
      %s73 = sphi 0, %s72
      %s87 = sphi 0, %s73
      %s91 = sphi 0, %s91
      %s93 = sphi 0, %s91
      %s94 = sphi 0, %s93
      %s108 = sphi 0, %s94
      %s112 = sphi 0, %s112
      %s114 = sphi 0, %s112
      %s115 = sphi 0, %s114
      %s129 = sphi 0, %s115
      %s135 = sphi 0, %s137
      %s138 = sphi 0, %s135
      %s139 = sphi 0, %s138
      %s155 = sphi 0, %s139
    $region4: #{tpu_custom_call.1} parent=1 // loop_header_branch
      %18 = sbr.rel (%p16) target = $region8
    $region5: #{tpu_custom_call.1} parent=1 // loop_body
      %s20 = ssub.s32 %s15, 1
      %s21 = ssub.s32 %s15, 2
      %s22 = sadd.s32 %s15, 1
      %s23 = ssub.s32 %s15, %s22
      %p24 = scmp.eq.s32.totalorder %s23, 0
      %s26 = sadd.s32 %s25, 1
      %s27 = scalar_select %p24, %s25, %s26
      %p30 = pneg %p24
      %p31 = scmp.eq.s32.totalorder %s15, 2
      %p32 = por %p30, %p31
      %p33 = scmp.ne.s32.totalorder %s25, %s28
      %p34 = scmp.eq.s32.totalorder %s15, 0
      %p35 = por %p33, %p34
      %p36 = scmp.ne.s32.totalorder %s25, %s28
      %p37 = scmp.eq.s32.totalorder %s20, 2
      %p38 = por %p36, %p37
      %p39 = scmp.ne.s32.totalorder %s28, %s29
      %p40 = scmp.eq.s32.totalorder %s20, 0
      %p41 = por %p39, %p40
      %p42 = scmp.ne.s32.totalorder %s28, %s29
      %p43 = scmp.eq.s32.totalorder %s21, 2
      %p44 = por %p42, %p43
      %p46 = scmp.ne.s32.totalorder %s29, %s45
      %p47 = scmp.eq.s32.totalorder %s21, 0
      %p48 = por %p46, %p47
      %s50 = sadd.s32 %s49, 1
      %p53 = scmp.eq.s32.totalorder %s15, 2
      %p54 = scmp.ne.s32.totalorder %s49, %s51
      %p55 = scmp.eq.s32.totalorder %s15, 0
      %p56 = por %p54, %p55
      %p57 = scmp.ne.s32.totalorder %s49, %s51
      %p58 = scmp.eq.s32.totalorder %s20, 2
      %p59 = por %p57, %p58
      %p60 = scmp.ne.s32.totalorder %s51, %s52
      %p61 = scmp.eq.s32.totalorder %s20, 0
      %p62 = por %p60, %p61
      %p63 = scmp.ne.s32.totalorder %s51, %s52
      %p64 = scmp.eq.s32.totalorder %s21, 2
      %p65 = por %p63, %p64
      %p67 = scmp.ne.s32.totalorder %s52, %s66
      %p68 = scmp.eq.s32.totalorder %s21, 0
      %p69 = por %p67, %p68
      %s71 = sadd.s32 %s70, 1
      %p74 = scmp.eq.s32.totalorder %s15, 2
      %p75 = scmp.ne.s32.totalorder %s70, %s72
      %p76 = scmp.eq.s32.totalorder %s15, 0
      %p77 = por %p75, %p76
      %p78 = scmp.ne.s32.totalorder %s70, %s72
      %p79 = scmp.eq.s32.totalorder %s20, 2
      %p80 = por %p78, %p79
      %p81 = scmp.ne.s32.totalorder %s72, %s73
      %p82 = scmp.eq.s32.totalorder %s20, 0
      %p83 = por %p81, %p82
      %p84 = scmp.ne.s32.totalorder %s72, %s73
      %p85 = scmp.eq.s32.totalorder %s21, 2
      %p86 = por %p84, %p85
      %p88 = scmp.ne.s32.totalorder %s73, %s87
      %p89 = scmp.eq.s32.totalorder %s21, 0
      %p90 = por %p88, %p89
      %s92 = sadd.s32 %s91, 1
      %p95 = scmp.eq.s32.totalorder %s15, 2
      %p96 = scmp.ne.s32.totalorder %s91, %s93
      %p97 = scmp.eq.s32.totalorder %s15, 0
      %p98 = por %p96, %p97
      %p99 = scmp.ne.s32.totalorder %s91, %s93
      %p100 = scmp.eq.s32.totalorder %s20, 2
      %p101 = por %p99, %p100
      %p102 = scmp.ne.s32.totalorder %s93, %s94
      %p103 = scmp.eq.s32.totalorder %s20, 0
      %p104 = por %p102, %p103
      %p105 = scmp.ne.s32.totalorder %s93, %s94
      %p106 = scmp.eq.s32.totalorder %s21, 2
      %p107 = por %p105, %p106
      %p109 = scmp.ne.s32.totalorder %s94, %s108
      %p110 = scmp.eq.s32.totalorder %s21, 0
      %p111 = por %p109, %p110
      %s113 = sadd.s32 %s112, 1
      %p116 = scmp.eq.s32.totalorder %s15, 2
      %p117 = scmp.ne.s32.totalorder %s112, %s114
      %p118 = scmp.eq.s32.totalorder %s15, 0
      %p119 = por %p117, %p118
      %p120 = scmp.ne.s32.totalorder %s112, %s114
      %p121 = scmp.eq.s32.totalorder %s20, 2
      %p122 = por %p120, %p121
      %p123 = scmp.ne.s32.totalorder %s114, %s115
      %p124 = scmp.eq.s32.totalorder %s20, 0
      %p125 = por %p123, %p124
      %p126 = scmp.ne.s32.totalorder %s114, %s115
      %p127 = scmp.eq.s32.totalorder %s21, 2
      %p128 = por %p126, %p127
      %p130 = scmp.ne.s32.totalorder %s115, %s129
      %p131 = scmp.eq.s32.totalorder %s21, 0
      %p132 = por %p130, %p131
      %s133 = ssub.s32 %s15, %s22
      %p134 = scmp.eq.s32.totalorder %s133, 0
      %s136 = sadd.s32 %s135, 1
      %s137 = scalar_select %p134, %s135, %s136
      %p140 = pneg %p134
      %p141 = scmp.eq.s32.totalorder %s15, 2
      %p142 = por %p140, %p141
      %p143 = scmp.ne.s32.totalorder %s135, %s138
      %p144 = scmp.eq.s32.totalorder %s15, 0
      %p145 = por %p143, %p144
      %p146 = scmp.ne.s32.totalorder %s135, %s138
      %p147 = scmp.eq.s32.totalorder %s20, 2
      %p148 = por %p146, %p147
      %p149 = scmp.ne.s32.totalorder %s138, %s139
      %p150 = scmp.eq.s32.totalorder %s20, 0
      %p151 = por %p149, %p150
      %p152 = scmp.ne.s32.totalorder %s138, %s139
      %p153 = scmp.eq.s32.totalorder %s21, 2
      %p154 = por %p152, %p153
      %p156 = scmp.ne.s32.totalorder %s139, %s155
      %p157 = scmp.eq.s32.totalorder %s21, 0
      %p158 = por %p156, %p157
      %p159 = scmp.le.s32.totalorder 1, %s15
      %p160 = scmp.lt.s32.totalorder %s15, 4
      %p161 = pnand %p159, %p160
      %p162 = pneg %p161
      // Predicated region
      $region9: #{tpu_custom_call.1} parent=5 // pred_check
        _
      $region10: #{tpu_custom_call.1} parent=5 // pred_check_branch
        %164 = sbr.rel (%p161) target = $region12
      $region11: #{tpu_custom_call.1} parent=5 // pred_region
        %s165 = ssub.s32 %s15, 1
        // Predicated region
        $region13: #{tpu_custom_call.1} parent=11 // pred_check
          %p166 = pneg %p62
        $region14: #{tpu_custom_call.1} parent=11 // pred_check_branch
          %168 = sbr.rel (%p166) target = $region16
        $region15: #{tpu_custom_call.1} parent=11 // pred_region
          _
        $region16: #{tpu_custom_call.1} parent=11 // pred_fallthru
          _
        // Predicated region
        $region17: #{tpu_custom_call.1} parent=11 // pred_check
          %p169 = pneg %p83
        $region18: #{tpu_custom_call.1} parent=11 // pred_check_branch
          %171 = sbr.rel (%p169) target = $region20
        $region19: #{tpu_custom_call.1} parent=11 // pred_region
          _
        $region20: #{tpu_custom_call.1} parent=11 // pred_fallthru
          _
        // Predicated region
        $region21: #{tpu_custom_call.1} parent=11 // pred_check
          %p172 = pneg %p104
        $region22: #{tpu_custom_call.1} parent=11 // pred_check_branch
          %174 = sbr.rel (%p172) target = $region24
        $region23: #{tpu_custom_call.1} parent=11 // pred_region
          %s176 = ssub.s32 1024, 1024
          %177 = vsyncadd [#allocation3], %s176
          %s178 = sshll.u32 [#allocation2], 4
          %s179 = int_to_ptr.vmem [resolvable:$true] %s178
          %184 = dma.hbm_to_vmem [thread:$0]  %s3, 1024, %s179, [#allocation3], 64, 64, 4
        $region24: #{tpu_custom_call.1} parent=11 // pred_fallthru
          _
        // Predicated region
        $region25: #{tpu_custom_call.1} parent=11 // pred_check
          %p185 = pneg %p125
        $region26: #{tpu_custom_call.1} parent=11 // pred_check_branch
          %187 = sbr.rel (%p185) target = $region28
        $region27: #{tpu_custom_call.1} parent=11 // pred_region
          _
        $region28: #{tpu_custom_call.1} parent=11 // pred_fallthru
          _
      $region12: #{tpu_custom_call.1} parent=5 // pred_fallthru
        _
      %p188 = scmp.lt.s32.totalorder %s15, 3
      // Predicated region
      $region29: #{tpu_custom_call.1} parent=5 // pred_check
        %p189 = pneg %p188
      $region30: #{tpu_custom_call.1} parent=5 // pred_check_branch
        %191 = sbr.rel (%p189) target = $region32
      $region31: #{tpu_custom_call.1} parent=5 // pred_region
        // Predicated region
        $region33: #{tpu_custom_call.1} parent=31 // pred_check
          %p192 = pneg %p35
        $region34: #{tpu_custom_call.1} parent=31 // pred_check_branch
          %194 = sbr.rel (%p192) target = $region36
        $region35: #{tpu_custom_call.1} parent=31 // pred_region
          %s195 = smul.u32 2, %s15
          %p196 = scmp.lt.s32.totalorder %s195, 5
          %s197 = scalar_select %p196, %s195, 5
          %s198 = smul.addr %s197, 4
          %s199 = scalar_lea.vmem %s0, %s198
          %s200 = smul.u32 2, %s15
        $region36: #{tpu_custom_call.1} parent=31 // pred_fallthru
          _
      $region32: #{tpu_custom_call.1} parent=5 // pred_fallthru
        _
      %p201 = scmp.le.s32.totalorder 1, %s15
      %p202 = scmp.lt.s32.totalorder %s15, 4
      %p203 = pnand %p201, %p202
      %p204 = pneg %p203
      // Predicated region
      $region37: #{tpu_custom_call.1} parent=5 // pred_check
        _
      $region38: #{tpu_custom_call.1} parent=5 // pred_check_branch
        %206 = sbr.rel (%p203) target = $region40
      $region39: #{tpu_custom_call.1} parent=5 // pred_region
        %s207 = ssub.s32 %s15, 1
        // Predicated region
        $region41: #{tpu_custom_call.1} parent=39 // pred_check
          %p208 = pneg %p104
        $region42: #{tpu_custom_call.1} parent=39 // pred_check_branch
          %210 = sbr.rel (%p208) target = $region44
        $region43: #{tpu_custom_call.1} parent=39 // pred_region
          %211 = dma.done [#allocation3], 1024
        $region44: #{tpu_custom_call.1} parent=39 // pred_fallthru
          _
        %s212 = smul.u32 2, %s20
        %p213 = scmp.lt.s32.totalorder %s212, 5
        %s214 = scalar_select %p213, %s212, 5
        %s215 = smul.addr %s214, 4
        %s216 = scalar_lea.vmem %s0, %s215
        %p217 = pneg %p41
        %p218 = pneg %p38
        %p219 = pneg %p62
        %p220 = pneg %p59
        %p221 = pneg %p83
        %p222 = pneg %p80
        %p223 = pneg %p104
        %p224 = pneg %p101
        %p225 = pneg %p125
        %p226 = pneg %p122
        %p227 = pneg %p151
        %p228 = pneg %p148
        %s229 = sand.u32 %s138, 1
        %s230 = scalar_lea.sflag [#allocation4], %s229
        %s231 = sand.u32 %s138, 1
        %s232 = smul.addr %s231, 16
        %s233 = scalar_lea.vmem [#allocation5], %s232
        %s234 = smul.u32 2, %s20
        %p235 = scmp.lt.s32.totalorder %s234, 5
        %s236 = scalar_select %p235, %s234, 5
        %s237 = smul.addr %s236, 4
        %s238 = scalar_lea.vmem %s0, %s237
        %s239 = smul.u32 2, %s20
        %s240 = smul.u32 2, %s20
        %v242 = vld [vmem:[%s238] sm:$0xf]
        %v243 = vld [vmem:[%s238 + $0x4] sm:$0xf]
        %v244 = vld [vmem:[%s1] sm:$0xf]
        %v245 = vld [vmem:[%s1 + $0x4] sm:$0xf]
        %v246 = vld [vmem:[%s1 + $0x8] sm:$0xf]
        %v247 = vld [vmem:[%s1 + $0xc] sm:$0xf]
        %v248 = vld [vmem:[%s2] sm:$0x1]
        %v250 = vlaneseq
        %v251 = vshrl.u32 %v250, 7
        %v252 = vsub.s32 0, %v251
        %v253 = vrot.slane %v248, %v252
        %v257 = vunpack.c.l.b16 %v242
        %v258 = vunpack.c.l.b16 %v243
        %v259 = vpack.c.b16 %v258, %v257
        %v264 = vunpack.c.l.b16 %v244
        %v265 = vunpack.c.l.b16 %v245
        %v266 = vunpack.c.l.b16 %v246
        %v267 = vunpack.c.l.b16 %v247
        %v268 = vpack.c.b16 %v265, %v264
        %v269 = vpack.c.b16 %v267, %v266
        %vm272 = vcmask 261120
        %v274 = vsel %vm272, %v259, 0
        %276 = vmatprep.subr.bf16.mxu0 0
        %277 = vmatpush1.bf16.msra.mxu0 %v268
        %278 = vmatprep.subr.bf16.mxu0 0
        %279 = vmatpush1.bf16.msra.mxu0 %v269
        %280 = vmatprep.subr.bf16.mxu0 0
        %281 = vmatpush1.bf16.msra.mxu0 0
        %282 = vmatprep.subr.bf16.mxu0 0
        %283 = vmatpush1.bf16.msra.mxu0 0
        %284 = vmatprep.subr.bf16.mxu0 0
        %285 = vmatpush1.bf16.msra.mxu0 0
        %286 = vmatprep.subr.bf16.mxu0 0
        %287 = vmatpush1.bf16.msra.mxu0 0
        %288 = vmatprep.subr.bf16.mxu0 0
        %289 = vmatpush1.bf16.msra.mxu0 0
        %290 = vmatprep.subr.bf16.mxu0 0
        %291 = vmatpush1.bf16.msra.mxu0 0
        %292 = vmatprep.subr.bf16.mxu0 0
        %293 = vmatpush1.bf16.msra.mxu0 0
        %294 = vmatprep.subr.bf16.mxu0 0
        %295 = vmatpush1.bf16.msra.mxu0 0
        %296 = vmatprep.subr.bf16.mxu0 0
        %297 = vmatpush1.bf16.msra.mxu0 0
        %298 = vmatprep.subr.bf16.mxu0 0
        %299 = vmatpush1.bf16.msra.mxu0 0
        %300 = vmatprep.subr.bf16.mxu0 0
        %301 = vmatpush1.bf16.msra.mxu0 0
        %302 = vmatprep.subr.bf16.mxu0 0
        %303 = vmatpush1.bf16.msra.mxu0 0
        %304 = vmatprep.subr.bf16.mxu0 0
        %305 = vmatpush1.bf16.msra.mxu0 0
        %306 = vmatprep.subr.bf16.mxu0 0
        %307 = vmatpush1.bf16.msra.mxu0 0
        %308 = vmatprep.mubr.bf16.mxu0 0
        %309 = vmatmul.mubr.bf16.gmra.mrb[0].mxu0 %v274
        %v310 = vpop.f32.mrb[0].mxu0
        %v311 = vadd.f32 %v253, %v310
        %v312 = vpop.f32.mrb[0].mxu0
        %v313 = vpop.f32.mrb[0].mxu0
        %v314 = vadd.f32 %v253, %v313
        %v315 = vpop.f32.mrb[0].mxu0
        %316 = vdwg.mxu0
        %v317 = vmax.f32 %v311, 0.0
        %v318 = vmax.f32 %v314, 0.0
        %v319 = vpack.c.bf16 %v318, %v317
        %v320 = vld [vmem:[#allocation2] sm:$0xf]
        %v321 = vld [vmem:[#allocation2 + $0x4] sm:$0xf]
        %v322 = vld [vmem:[#allocation2 + $0x8] sm:$0xf]
        %v323 = vld [vmem:[#allocation2 + $0xc] sm:$0xf]
        %v324 = vld [vmem:[#allocation2 + $0x10] sm:$0xf]
        %v325 = vld [vmem:[#allocation2 + $0x14] sm:$0xf]
        %v326 = vld [vmem:[#allocation2 + $0x18] sm:$0xf]
        %v327 = vld [vmem:[#allocation2 + $0x1c] sm:$0xf]
        %v328 = vld [vmem:[#allocation2 + $0x20] sm:$0xf]
        %v329 = vld [vmem:[#allocation2 + $0x24] sm:$0xf]
        %v330 = vld [vmem:[#allocation2 + $0x28] sm:$0xf]
        %v331 = vld [vmem:[#allocation2 + $0x2c] sm:$0xf]
        %v332 = vld [vmem:[#allocation2 + $0x30] sm:$0xf]
        %v333 = vld [vmem:[#allocation2 + $0x34] sm:$0xf]
        %v334 = vld [vmem:[#allocation2 + $0x38] sm:$0xf]
        %v335 = vld [vmem:[#allocation2 + $0x3c] sm:$0xf]
        %v336 = vld [vmem:[%s4] sm:$0x1]
        %v338 = vlaneseq
        %v339 = vshrl.u32 %v338, 7
        %v340 = vsub.s32 0, %v339
        %v341 = vrot.slane %v336, %v340
        %v359 = vunpack.c.l.b16 %v320
        %v360 = vunpack.c.l.b16 %v321
        %v361 = vunpack.c.l.b16 %v322
        %v362 = vunpack.c.l.b16 %v323
        %v363 = vunpack.c.l.b16 %v324
        %v364 = vunpack.c.l.b16 %v325
        %v365 = vunpack.c.l.b16 %v326
        %v366 = vunpack.c.l.b16 %v327
        %v367 = vunpack.c.l.b16 %v328
        %v368 = vunpack.c.l.b16 %v329
        %v369 = vunpack.c.l.b16 %v330
        %v370 = vunpack.c.l.b16 %v331
        %v371 = vunpack.c.l.b16 %v332
        %v372 = vunpack.c.l.b16 %v333
        %v373 = vunpack.c.l.b16 %v334
        %v374 = vunpack.c.l.b16 %v335
        %v375 = vpack.c.b16 %v360, %v359
        %v376 = vpack.c.b16 %v362, %v361
        %v377 = vpack.c.b16 %v364, %v363
        %v378 = vpack.c.b16 %v366, %v365
        %v379 = vpack.c.b16 %v368, %v367
        %v380 = vpack.c.b16 %v370, %v369
        %v381 = vpack.c.b16 %v372, %v371
        %v382 = vpack.c.b16 %v374, %v373
        %391 = vmatprep.subr.bf16.mxu0 0
        %392 = vmatpush1.bf16.msra.mxu0 %v375
        %393 = vmatprep.subr.bf16.mxu0 0
        %394 = vmatpush1.bf16.msra.mxu0 %v376
        %395 = vmatprep.subr.bf16.mxu0 0
        %396 = vmatpush1.bf16.msra.mxu0 %v377
        %397 = vmatprep.subr.bf16.mxu0 0
        %398 = vmatpush1.bf16.msra.mxu0 %v378
        %399 = vmatprep.subr.bf16.mxu0 0
        %400 = vmatpush1.bf16.msra.mxu0 %v379
        %401 = vmatprep.subr.bf16.mxu0 0
        %402 = vmatpush1.bf16.msra.mxu0 %v380
        %403 = vmatprep.subr.bf16.mxu0 0
        %404 = vmatpush1.bf16.msra.mxu0 %v381
        %405 = vmatprep.subr.bf16.mxu0 0
        %406 = vmatpush1.bf16.msra.mxu0 %v382
        %407 = vmatprep.subr.bf16.mxu0 0
        %408 = vmatpush1.bf16.msra.mxu0 0
        %409 = vmatprep.subr.bf16.mxu0 0
        %410 = vmatpush1.bf16.msra.mxu0 0
        %411 = vmatprep.subr.bf16.mxu0 0
        %412 = vmatpush1.bf16.msra.mxu0 0
        %413 = vmatprep.subr.bf16.mxu0 0
        %414 = vmatpush1.bf16.msra.mxu0 0
        %415 = vmatprep.subr.bf16.mxu0 0
        %416 = vmatpush1.bf16.msra.mxu0 0
        %417 = vmatprep.subr.bf16.mxu0 0
        %418 = vmatpush1.bf16.msra.mxu0 0
        %419 = vmatprep.subr.bf16.mxu0 0
        %420 = vmatpush1.bf16.msra.mxu0 0
        %421 = vmatprep.subr.bf16.mxu0 0
        %422 = vmatpush1.bf16.msra.mxu0 0
        %423 = vmatprep.mubr.bf16.mxu0 0
        %424 = vmatmul.mubr.bf16.gmra.mrb[0].mxu0 %v319
        %v425 = vpop.f32.mrb[0].mxu0
        %v426 = vadd.f32 %v341, %v425
        %v427 = vpop.f32.mrb[0].mxu0
        %v428 = vpop.f32.mrb[0].mxu0
        %v429 = vadd.f32 %v341, %v428
        %v430 = vpop.f32.mrb[0].mxu0
        %431 = vdwg.mxu0
        %432 = vst [vmem:[%s233] sm:$0xff] %v426
        %433 = vst [vmem:[%s233 + $0x8] sm:$0xff] %v429
        %s434 = sand.u32 %s138, 1
        %s435 = scalar_lea.sflag [#allocation4], %s434
        %s436 = sand.u32 %s138, 1
        %s437 = smul.addr %s436, 16
        %s438 = scalar_lea.vmem [#allocation5], %s437
        // Predicated region
        $region45: #{tpu_custom_call.1} parent=39 // pred_check
          %p439 = pneg %p148
        $region46: #{tpu_custom_call.1} parent=39 // pred_check_branch
          %441 = sbr.rel (%p439) target = $region48
        $region47: #{tpu_custom_call.1} parent=39 // pred_region
          %s442 = smul.u32 2, %s20
          %s444 = ssub.s32 256, 256
          %445 = vsyncadd %s435, %s444
          %s446 = smul.addr %s442, 128
          %s447 = scalar_lea.hbm %s5, %s446
          %s448 = sshll.u32 %s438, 4
          %s449 = int_to_ptr.vmem [resolvable:$true] %s448
          %454 = dma.vmem_to_hbm [thread:$0]  %s449, 256, %s447, %s435, 128, 128, 8
        $region48: #{tpu_custom_call.1} parent=39 // pred_fallthru
          _
      $region40: #{tpu_custom_call.1} parent=5 // pred_fallthru
        _
      %p455 = scmp.le.s32.totalorder 2, %s15
      // Predicated region
      $region49: #{tpu_custom_call.1} parent=5 // pred_check
        %p456 = pneg %p455
      $region50: #{tpu_custom_call.1} parent=5 // pred_check_branch
        %458 = sbr.rel (%p456) target = $region52
      $region51: #{tpu_custom_call.1} parent=5 // pred_region
        %s459 = ssub.s32 %s15, 2
        // Predicated region
        $region53: #{tpu_custom_call.1} parent=51 // pred_check
          %p460 = pneg %p154
        $region54: #{tpu_custom_call.1} parent=51 // pred_check_branch
          %462 = sbr.rel (%p460) target = $region56
        $region55: #{tpu_custom_call.1} parent=51 // pred_region
          %s463 = sand.u32 %s139, 1
          %s464 = scalar_lea.sflag [#allocation4], %s463
          %s465 = sand.u32 %s139, 1
          %s466 = smul.addr %s465, 16
          %s467 = scalar_lea.vmem [#allocation5], %s466
          %468 = dma.done %s464, 256
        $region56: #{tpu_custom_call.1} parent=51 // pred_fallthru
          _
      $region52: #{tpu_custom_call.1} parent=5 // pred_fallthru
        _
    $region6: #{tpu_custom_call.1} parent=1 // loop_footer
      %s19 = sadd.s32 1, %s15
    $region7: #{tpu_custom_call.1} parent=1 // loop_footer_branch
      %14 = sbr.rel target = $region3
    $region8: #{tpu_custom_call.1} parent=1 // loop_exit
      _
    %469 = vsyncpa [#allocation3], 1
    %s470 = scalar_lea.sflag [#allocation3], 1
    %471 = vsyncpa %s470, 1
    %472 = vsyncpa [#allocation4], 1
    %s473 = scalar_lea.sflag [#allocation4], 1
    %474 = vsyncpa %s473, 1

</llo_original>
